<compile_context>
chip_gen: v7x
topology: tpu7x:2x2x1
jax: 0.10.0
libtpu: 0.0.40
codegen_flags: <defaults>
</compile_context>

<pallas_src>
import functools

import jax
import jax.numpy as jnp
from jax.experimental import pallas as pl
from jax.experimental.pallas import tpu as pltpu


def _round_up(x, m):
    return ((x + m - 1) // m) * m


def _vmem_capacity_bytes():
    """Physical VMEM per TensorCore; conservative default if the query fails."""
    try:
        info = pltpu.get_tpu_info()
        cap = int(getattr(info, "vmem_capacity_bytes", 0) or 0)
        if cap > 0:
            return cap
    except Exception:
        pass
    return 64 << 20  # v7x per-TC size: the tightest of v5e/v6e/v7x


def _plan(B, C, H, W, K, budget_bytes):
    """Pick (Bt, TH) so each fg/bg/out tile ~<= budget and there are >= 4 grid steps."""
    pad = K // 2
    min_steps = 4                              # >= 2 * num TensorCores (v7x has 2)

    lane_w = _round_up(W, 128)                 # lanes actually occupied in VMEM
    Wp_t = _round_up(W + 2 * pad, 128)         # padded-alpha lane width
    row_bytes = C * lane_w * 4                 # one f32 image row inside a tile
    H8 = _round_up(H, 8)

    img_bytes = H8 * row_bytes                 # whole image as one tile
    plane_rows0 = _round_up(H + 2 * pad, 8)
    alpha_item = plane_rows0 * Wp_t * 2        # resident padded alpha (bf16) per item

    if img_bytes + alpha_item <= budget_bytes:
        TH, Bt = H8, 1
        # Pack several batch items per step, but keep >= min_steps grid steps.
        for d in sorted((d for d in range(1, B + 1) if B % d == 0), reverse=True):
            if d * (img_bytes + alpha_item) <= budget_bytes and B // d >= min_steps:
                Bt = d
                break
    else:
        Bt = 1
        TH = max(8, min(H8, (budget_bytes // row_bytes) // 8 * 8))
    if TH > H:
        TH = H                                 # single row block equal to the full dim

    # Guarantee enough parallel grid steps for megacore sharding (v7x: 2 TCs).
    nTH = pl.cdiv(H, TH)
    while Bt == 1 and B * nTH < min_steps and TH > 8:
        TH = max(8, ((TH // 2) + 7) // 8 * 8)
        nTH = pl.cdiv(H, TH)
    nB = B // Bt
    return Bt, TH, nB, nTH, lane_w, Wp_t


def _alpha_blend_kernel(alpha_ref, fg_ref, bg_ref, out_ref, *,
                        K, TH, W, THp_t, scale, resident):
    # alpha_ref: resident -> (Bt, plane_rows, Wp_t) bf16 padded alpha plane
    #            windowed -> (Bt, THp_t,      Wp_t) bf16 padded halo window
    # fg/bg/out: (Bt, C, TH, W) f32
    if resident:
        row0 = pl.program_id(1) * TH
        if TH % 8 == 0:
            row0 = pl.multiple_of(row0, 8)
        ap = alpha_ref[:, pl.ds(row0, THp_t), :].astype(jnp.float32)
    else:
        ap = alpha_ref[...].astype(jnp.float32)

    rows, lanes = ap.shape[1], ap.shape[2]

    # Separable box sum of raw integer alpha values (exact in f32).  pltpu.roll
    # keeps the shifts on the XLU; wrap-around only reaches columns >= W /
    # rows >= TH (because lanes >= W + 2*pad and rows >= TH + 2*pad), and those
    # are sliced away below.
    h = ap
    for kj in range(1, K):
        h = h + pltpu.roll(ap, shift=lanes - kj, axis=2)     # shift-left by kj
    v = h
    for ki in range(1, K):
        v = v + pltpu.roll(h, shift=rows - ki, axis=1)       # shift-up by ki

    a = (v[:, :TH, :W] * scale)[:, None, :, :]               # blurred alpha / (255*K*K)
    fg = fg_ref[...]
    bg = bg_ref[...]
    out_ref[...] = (bg + a * (fg - bg)).astype(out_ref.dtype)


def alpha_blend(fg, bg, alpha, kernel_size=5):
    """fg, bg: (B, C, H, W) float32; alpha: (B, H, W) uint8 (0..255)."""
    B, C, H, W = fg.shape
    K = kernel_size
    pad = K // 2

    vmem_cap = _vmem_capacity_bytes()
    budget = max(1 << 20, vmem_cap // 20)      # per fg/bg/out tile target

    Bt, TH, nB, nTH, lane_w, Wp_t = _plan(B, C, H, W, K, budget)
    THp_t = _round_up(TH + 2 * pad, 8)
    plane_rows = max(_round_up(H + 2 * pad, 8), (nTH - 1) * TH + THp_t)

    a_bf16 = alpha.astype(jnp.bfloat16)        # exact for integers 0..255

    resident = Bt * plane_rows * Wp_t * 2 <= budget
    if resident:
        # One padded plane per image; fetched once per batch block (its block
        # index does not change across the row-tile grid axis).
        a_in = jnp.pad(a_bf16, ((0, 0),
                                (pad, plane_rows - H - pad),
                                (pad, Wp_t - W - pad)))
        alpha_spec = pl.BlockSpec((Bt, plane_rows, Wp_t), lambda b, r: (b, 0, 0))
        alpha_vmem = 2 * Bt * plane_rows * Wp_t * 2
        alpha_hbm = B * plane_rows * Wp_t * 2
    else:
        # Fallback for very large planes: per-row-tile halo windows (duplicated
        # halo rows are negligible relative to such large images).
        rows_needed = (nTH - 1) * TH + THp_t
        a_pad = jnp.pad(a_bf16, ((0, 0),
                                 (pad, rows_needed - H - pad),
                                 (pad, Wp_t - W - pad)))
        a_in = jnp.stack([a_pad[:, r * TH:r * TH + THp_t, :] for r in range(nTH)],
                         axis=1)               # (B, nTH, THp_t, Wp_t)
        alpha_spec = pl.BlockSpec((Bt, None, THp_t, Wp_t), lambda b, r: (b, r, 0, 0))
        alpha_vmem = 2 * Bt * THp_t * Wp_t * 2
        alpha_hbm = B * nTH * THp_t * Wp_t * 2

    scale = 1.0 / (255.0 * float(K * K))       # frozen uniform conv weight folded in
    kernel = functools.partial(_alpha_blend_kernel, K=K, TH=TH, W=W,
                               THp_t=THp_t, scale=scale, resident=resident)

    # VMEM accounting: double-buffered fg/bg/out blocks + alpha + f32 temporaries
    # (ap, h, v plus one fg-sized temp), with headroom, capped at 75% of physical.
    io_vmem = 2 * 3 * Bt * C * TH * lane_w * 4
    tmp_vmem = (3 * Bt * THp_t * Wp_t + Bt * C * TH * lane_w) * 4
    need = io_vmem + alpha_vmem + tmp_vmem
    vmem_limit = int(min(vmem_cap * 3 // 4,
                         max(32 << 20, int(1.3 * need) + (2 << 20))))

    flops = int(B * H * W * (2 * (K - 1) + 1 + 3 * C))
    bytes_accessed = int(3 * B * C * H * W * 4 + alpha_hbm)

    return pl.pallas_call(
        kernel,
        out_shape=jax.ShapeDtypeStruct((B, C, H, W), fg.dtype),
        grid=(nB, nTH),
        in_specs=[
            alpha_spec,
            pl.BlockSpec((Bt, C, TH, W), lambda b, r: (b, 0, r, 0)),   # fg
            pl.BlockSpec((Bt, C, TH, W), lambda b, r: (b, 0, r, 0)),   # bg
        ],
        out_specs=pl.BlockSpec((Bt, C, TH, W), lambda b, r: (b, 0, r, 0)),
        compiler_params=pltpu.CompilerParams(
            dimension_semantics=("parallel", "parallel"),
            vmem_limit_bytes=vmem_limit,
        ),
        cost_estimate=pl.CostEstimate(
            flops=flops, transcendentals=0, bytes_accessed=bytes_accessed
        ),
    )(a_in, fg, bg)


def _reference(fg, bg, alpha, kernel_size):
    """Pure-JAX mirror of the PyTorch forward (zero-padded K x K box filter, f32)."""
    K = kernel_size
    pad = K // 2
    B, H, W = alpha.shape
    a = alpha.astype(jnp.float32) / 255.0
    ap = jnp.pad(a, ((0, 0), (pad, pad), (pad, pad)))
    blur = jnp.zeros_like(a)
    for di in range(K):
        for dj in range(K):
            blur = blur + ap[:, di:di + H, dj:dj + W]
    blur = blur / float(K * K)
    return fg * blur[:, None, :, :] + bg * (1.0 - blur[:, None, :, :])


if __name__ == "__main__":
    B, C, H, W = 2, 3, 16, 16
    K = 5

    key = jax.random.PRNGKey(0)
    kf, kb, ka = jax.random.split(key, 3)
    fg = jax.random.uniform(kf, (B, C, H, W), jnp.float32)
    bg = jax.random.uniform(kb, (B, C, H, W), jnp.float32)
    alpha = jax.random.randint(ka, (B, H, W), 0, 256, jnp.int32).astype(jnp.uint8)

    out = alpha_blend(fg, bg, alpha, kernel_size=K)
    jax.block_until_ready(out)

    ref = _reference(fg, bg, alpha, K)
    assert out.shape == (B, C, H, W)
    err = float(jnp.max(jnp.abs(out - ref)))
    assert jnp.allclose(out, ref, atol=1e-5, rtol=1e-5), err

    print("KERNEL_OK")
</pallas_src>

<mosaic_0001>
module attributes {stable_mosaic.version = 11 : i64} {
  func.func @_alpha_blend_kernel(%arg0: i32, %arg1: i32, %arg2: memref<1x24x128xbf16, #tpu.memory_space<vmem>>, %arg3: memref<1x3x8x16xf32, #tpu.memory_space<vmem>>, %arg4: memref<1x3x8x16xf32, #tpu.memory_space<vmem>>, %arg5: memref<1x3x8x16xf32, #tpu.memory_space<vmem>>) attributes {dimension_semantics = [#tpu.dimension_semantics<parallel>, #tpu.dimension_semantics<parallel>], iteration_bounds = array<i64: 2, 2>, scalar_prefetch = 0 : i64, scratch_operands = 0 : i64, tpu.core_type = #tpu.core_type<tc>, window_params = [{transform_indices = @transform_0, window_bounds = array<i64: 1, 24, 128>}, {transform_indices = @transform_1, window_bounds = array<i64: 1, 3, 8, 16>}, {transform_indices = @transform_2, window_bounds = array<i64: 1, 3, 8, 16>}, {transform_indices = @transform_3, window_bounds = array<i64: 1, 3, 8, 16>}]} {
    %c8_i32 = arith.constant 8 : i32
    %0 = arith.muli %arg1, %c8_i32 : i32
    %1 = tpu.assume_multiple %0, 8 : i32
    %c0 = arith.constant 0 : index
    %2 = arith.index_cast %1 : i32 to index
    %c0_0 = arith.constant 0 : index
    %3 = vector.load %arg2[%c0, %2, %c0_0] : memref<1x24x128xbf16, #tpu.memory_space<vmem>>, vector<1x16x128xbf16>
    %4 = arith.extf %3 : vector<1x16x128xbf16> to vector<1x16x128xf32>
    %c127_i32 = arith.constant 127 : i32
    %5 = tpu.dynamic_rotate %4 by %c127_i32 dim 2 : vector<1x16x128xf32>, i32 -> vector<1x16x128xf32>
    %6 = arith.addf %4, %5 : vector<1x16x128xf32>
    %c126_i32 = arith.constant 126 : i32
    %7 = tpu.dynamic_rotate %4 by %c126_i32 dim 2 : vector<1x16x128xf32>, i32 -> vector<1x16x128xf32>
    %8 = arith.addf %6, %7 : vector<1x16x128xf32>
    %c125_i32 = arith.constant 125 : i32
    %9 = tpu.dynamic_rotate %4 by %c125_i32 dim 2 : vector<1x16x128xf32>, i32 -> vector<1x16x128xf32>
    %10 = arith.addf %8, %9 : vector<1x16x128xf32>
    %c124_i32 = arith.constant 124 : i32
    %11 = tpu.dynamic_rotate %4 by %c124_i32 dim 2 : vector<1x16x128xf32>, i32 -> vector<1x16x128xf32>
    %12 = arith.addf %10, %11 : vector<1x16x128xf32>
    %c15_i32 = arith.constant 15 : i32
    %13 = tpu.dynamic_rotate %12 by %c15_i32 dim 1 : vector<1x16x128xf32>, i32 -> vector<1x16x128xf32>
    %14 = arith.addf %12, %13 : vector<1x16x128xf32>
    %c14_i32 = arith.constant 14 : i32
    %15 = tpu.dynamic_rotate %12 by %c14_i32 dim 1 : vector<1x16x128xf32>, i32 -> vector<1x16x128xf32>
    %16 = arith.addf %14, %15 : vector<1x16x128xf32>
    %c13_i32 = arith.constant 13 : i32
    %17 = tpu.dynamic_rotate %12 by %c13_i32 dim 1 : vector<1x16x128xf32>, i32 -> vector<1x16x128xf32>
    %18 = arith.addf %16, %17 : vector<1x16x128xf32>
    %c12_i32 = arith.constant 12 : i32
    %19 = tpu.dynamic_rotate %12 by %c12_i32 dim 1 : vector<1x16x128xf32>, i32 -> vector<1x16x128xf32>
    %20 = arith.addf %18, %19 : vector<1x16x128xf32>
    %21 = vector.extract_strided_slice %20 {offsets = [0, 0, 0], sizes = [1, 8, 16], strides = [1, 1, 1]} : vector<1x16x128xf32> to vector<1x8x16xf32>
    %cst = arith.constant 1.56862749E-4 : f32
    %22 = vector.broadcast %cst : f32 to vector<1x8x16xf32>
    %23 = arith.mulf %21, %22 : vector<1x8x16xf32>
    %24 = vector.shape_cast %23 : vector<1x8x16xf32> to vector<1x1x8x16xf32>
    %c0_1 = arith.constant 0 : index
    %c0_2 = arith.constant 0 : index
    %c0_3 = arith.constant 0 : index
    %c0_4 = arith.constant 0 : index
    %25 = vector.load %arg3[%c0_1, %c0_2, %c0_3, %c0_4] : memref<1x3x8x16xf32, #tpu.memory_space<vmem>>, vector<1x3x8x16xf32>
    %c0_5 = arith.constant 0 : index
    %c0_6 = arith.constant 0 : index
    %c0_7 = arith.constant 0 : index
    %c0_8 = arith.constant 0 : index
    %26 = vector.load %arg4[%c0_5, %c0_6, %c0_7, %c0_8] : memref<1x3x8x16xf32, #tpu.memory_space<vmem>>, vector<1x3x8x16xf32>
    %27 = arith.subf %25, %26 : vector<1x3x8x16xf32>
    %28 = vector.broadcast %24 : vector<1x1x8x16xf32> to vector<1x3x8x16xf32>
    %29 = arith.mulf %28, %27 : vector<1x3x8x16xf32>
    %30 = arith.addf %26, %29 : vector<1x3x8x16xf32>
    %c0_9 = arith.constant 0 : index
    %c0_10 = arith.constant 0 : index
    %c0_11 = arith.constant 0 : index
    %c0_12 = arith.constant 0 : index
    %31 = vector.load %arg5[%c0_9, %c0_10, %c0_11, %c0_12] : memref<1x3x8x16xf32, #tpu.memory_space<vmem>>, vector<1x3x8x16xf32>
    tpu.vector_store %arg5[%c0_9, %c0_10, %c0_11, %c0_12], %30 {strides = array<i32>} : memref<1x3x8x16xf32, #tpu.memory_space<vmem>>, vector<1x3x8x16xf32>,
    return
  }
  func.func @transform_0(%arg0: i32, %arg1: i32) -> (i32, i32, i32) {
    %c0_i32 = arith.constant 0 : i32
    %c0_i32_0 = arith.constant 0 : i32
    %c0_i32_1 = arith.constant 0 : i32
    return %arg0, %c0_i32, %c0_i32_0 : i32, i32, i32
  }
  func.func @transform_1(%arg0: i32, %arg1: i32) -> (i32, i32, i32, i32) {
    %c0_i32 = arith.constant 0 : i32
    %c0_i32_0 = arith.constant 0 : i32
    %c0_i32_1 = arith.constant 0 : i32
    return %arg0, %c0_i32, %arg1, %c0_i32_0 : i32, i32, i32, i32
  }
  func.func @transform_2(%arg0: i32, %arg1: i32) -> (i32, i32, i32, i32) {
    %c0_i32 = arith.constant 0 : i32
    %c0_i32_0 = arith.constant 0 : i32
    %c0_i32_1 = arith.constant 0 : i32
    return %arg0, %c0_i32, %arg1, %c0_i32_0 : i32, i32, i32, i32
  }
  func.func @transform_3(%arg0: i32, %arg1: i32) -> (i32, i32, i32, i32) {
    %c0_i32 = arith.constant 0 : i32
    %c0_i32_0 = arith.constant 0 : i32
    %c0_i32_1 = arith.constant 0 : i32
    return %arg0, %c0_i32, %arg1, %c0_i32_0 : i32, i32, i32, i32
  }
}

</mosaic_0001>

<llo_original>
// kernel: tpu_custom_call.1
$region0: #{tpu_custom_call.1}
  #allocation0 [shape = 'u32[]', space=smem, size = 0x4, offset = 0x4, fixed_abs, tag = 'smem constant byte address 0x4 - core index']
  #allocation1 [shape = 'u32[144,128]{1,0:T(1,128)}', space=vmem, size = 0x12000, scoped, tag = 'internal scratch']
  %s0 = inlined_call_operand.hbm [shape: bf16[2,24,128], index: 0, kind: input, shape index: {}]
  %s1 = inlined_call_operand.hbm [shape: f32[2,3,16,16], index: 1, kind: input, shape index: {}]
  %s2 = inlined_call_operand.hbm [shape: f32[2,3,16,16], index: 2, kind: input, shape index: {}]
  %s3 = inlined_call_operand.hbm [shape: f32[2,3,16,16], index: 3, kind: output, shape index: {}]
  %s4 = sld [smem:[#allocation0]]
  $region57: #{tpu_custom_call.1} parent=0
    _
  %s6 = ssub.s32 1, %s4
  %s7 = scalar_select 0, %s6, %s4
  $region1: #{tpu_custom_call.1} parent=0
    #allocation2 [shape = 'u8[12288]{0}', space=vmem, size = 0x3000, scoped, tag = 'input window, operand 0']
    #allocation3 [shape = 's32[2]{0}', space=sflag, size = 0x8, scoped, tag = 'scoped memory for tpu_custom_call.1']
    #allocation4 [shape = 's32[2]{0}', space=sflag, size = 0x8, scoped, tag = 'scoped memory for tpu_custom_call.1']
    #allocation5 [shape = 'u8[24576]{0}', space=vmem, size = 0x6000, scoped, tag = 'input window, operand 1']
    #allocation6 [shape = 's32[2]{0}', space=sflag, size = 0x8, scoped, tag = 'scoped memory for tpu_custom_call.1']
    #allocation7 [shape = 'u8[24576]{0}', space=vmem, size = 0x6000, scoped, tag = 'input window, operand 2']
    #allocation8 [shape = 'u8[24576]{0}', space=vmem, size = 0x6000, scoped, tag = 'output window, operand 0']
    %8 = vsyncpa [#allocation3], 0
    %s9 = scalar_lea.sflag [#allocation3], 1
    %10 = vsyncpa %s9, 0
    %11 = vsyncpa [#allocation6], 0
    %s12 = scalar_lea.sflag [#allocation6], 1
    %13 = vsyncpa %s12, 0
    %14 = vsyncpa [#allocation4], 0
    %s15 = scalar_lea.sflag [#allocation4], 1
    %16 = vsyncpa %s15, 0
    loop: start=0, step=1, limit=6
    $region2: #{tpu_custom_call.1} parent=1 // loop_pre_header
      _
    $region3: #{tpu_custom_call.1} parent=1 // loop_header
      %s18 = sphi 0, %s22
      %p19 = scmp.ge.s32.totalorder %s18, 6
      %s25 = sphi 0, %s37
      %s26 = sphi 0, %s33
      %s27 = sphi 0, %s25
      %s28 = sphi 0, %s26
      %s29 = sphi 0, %s27
      %s30 = sphi 0, %s28
      %s40 = sphi 0, %s42
      %s43 = sphi 0, %s40
      %s44 = sphi 0, %s43
      %s60 = sphi 0, %s44
      %s68 = sphi 0, %s70
      %s71 = sphi 0, %s68
      %s72 = sphi 0, %s71
      %s88 = sphi 0, %s72
      %s96 = sphi 0, %s98
      %s99 = sphi 0, %s96
      %s100 = sphi 0, %s99
      %s116 = sphi 0, %s100
      %s124 = sphi 0, %s126
      %s127 = sphi 0, %s124
      %s128 = sphi 0, %s127
      %s144 = sphi 0, %s128
    $region4: #{tpu_custom_call.1} parent=1 // loop_header_branch
      %21 = sbr.rel (%p19) target = $region8
    $region5: #{tpu_custom_call.1} parent=1 // loop_body
      %s23 = ssub.s32 %s18, 1
      %s24 = ssub.s32 %s18, 2
      %s31 = sadd.s32 1, %s26
      %p32 = scmp.ge.s32.totalorder %s31, 2
      %s33 = scalar_select %p32, 0, %s31
      %s34 = sadd.s32 1, %s25
      %s35 = scalar_select %p32, %s34, %s25
      %p36 = scmp.ge.s32.totalorder %s35, 2
      %s37 = scalar_select %p36, 0, %s35
      %s38 = ssub.s32 %s25, %s37
      %p39 = scmp.eq.s32.totalorder %s38, 0
      %s41 = sadd.s32 %s40, 1
      %s42 = scalar_select %p39, %s40, %s41
      %p45 = pneg %p39
      %p46 = scmp.eq.s32.totalorder %s18, 3
      %p47 = por %p45, %p46
      %p48 = scmp.ne.s32.totalorder %s40, %s43
      %p49 = scmp.eq.s32.totalorder %s18, 0
      %p50 = por %p48, %p49
      %p51 = scmp.ne.s32.totalorder %s40, %s43
      %p52 = scmp.eq.s32.totalorder %s23, 3
      %p53 = por %p51, %p52
      %p54 = scmp.ne.s32.totalorder %s43, %s44
      %p55 = scmp.eq.s32.totalorder %s23, 0
      %p56 = por %p54, %p55
      %p57 = scmp.ne.s32.totalorder %s43, %s44
      %p58 = scmp.eq.s32.totalorder %s24, 3
      %p59 = por %p57, %p58
      %p61 = scmp.ne.s32.totalorder %s44, %s60
      %p62 = scmp.eq.s32.totalorder %s24, 0
      %p63 = por %p61, %p62
      %s64 = ssub.s32 %s25, %s37
      %s65 = ssub.s32 %s26, %s33
      %s66 = sor.u32 %s64, %s65
      %p67 = scmp.eq.s32.totalorder %s66, 0
      %s69 = sadd.s32 %s68, 1
      %s70 = scalar_select %p67, %s68, %s69
      %p73 = pneg %p67
      %p74 = scmp.eq.s32.totalorder %s18, 3
      %p75 = por %p73, %p74
      %p76 = scmp.ne.s32.totalorder %s68, %s71
      %p77 = scmp.eq.s32.totalorder %s18, 0
      %p78 = por %p76, %p77
      %p79 = scmp.ne.s32.totalorder %s68, %s71
      %p80 = scmp.eq.s32.totalorder %s23, 3
      %p81 = por %p79, %p80
      %p82 = scmp.ne.s32.totalorder %s71, %s72
      %p83 = scmp.eq.s32.totalorder %s23, 0
      %p84 = por %p82, %p83
      %p85 = scmp.ne.s32.totalorder %s71, %s72
      %p86 = scmp.eq.s32.totalorder %s24, 3
      %p87 = por %p85, %p86
      %p89 = scmp.ne.s32.totalorder %s72, %s88
      %p90 = scmp.eq.s32.totalorder %s24, 0
      %p91 = por %p89, %p90
      %s92 = ssub.s32 %s25, %s37
      %s93 = ssub.s32 %s26, %s33
      %s94 = sor.u32 %s92, %s93
      %p95 = scmp.eq.s32.totalorder %s94, 0
      %s97 = sadd.s32 %s96, 1
      %s98 = scalar_select %p95, %s96, %s97
      %p101 = pneg %p95
      %p102 = scmp.eq.s32.totalorder %s18, 3
      %p103 = por %p101, %p102
      %p104 = scmp.ne.s32.totalorder %s96, %s99
      %p105 = scmp.eq.s32.totalorder %s18, 0
      %p106 = por %p104, %p105
      %p107 = scmp.ne.s32.totalorder %s96, %s99
      %p108 = scmp.eq.s32.totalorder %s23, 3
      %p109 = por %p107, %p108
      %p110 = scmp.ne.s32.totalorder %s99, %s100
      %p111 = scmp.eq.s32.totalorder %s23, 0
      %p112 = por %p110, %p111
      %p113 = scmp.ne.s32.totalorder %s99, %s100
      %p114 = scmp.eq.s32.totalorder %s24, 3
      %p115 = por %p113, %p114
      %p117 = scmp.ne.s32.totalorder %s100, %s116
      %p118 = scmp.eq.s32.totalorder %s24, 0
      %p119 = por %p117, %p118
      %s120 = ssub.s32 %s25, %s37
      %s121 = ssub.s32 %s26, %s33
      %s122 = sor.u32 %s120, %s121
      %p123 = scmp.eq.s32.totalorder %s122, 0
      %s125 = sadd.s32 %s124, 1
      %s126 = scalar_select %p123, %s124, %s125
      %p129 = pneg %p123
      %p130 = scmp.eq.s32.totalorder %s18, 3
      %p131 = por %p129, %p130
      %p132 = scmp.ne.s32.totalorder %s124, %s127
      %p133 = scmp.eq.s32.totalorder %s18, 0
      %p134 = por %p132, %p133
      %p135 = scmp.ne.s32.totalorder %s124, %s127
      %p136 = scmp.eq.s32.totalorder %s23, 3
      %p137 = por %p135, %p136
      %p138 = scmp.ne.s32.totalorder %s127, %s128
      %p139 = scmp.eq.s32.totalorder %s23, 0
      %p140 = por %p138, %p139
      %p141 = scmp.ne.s32.totalorder %s127, %s128
      %p142 = scmp.eq.s32.totalorder %s24, 3
      %p143 = por %p141, %p142
      %p145 = scmp.ne.s32.totalorder %s128, %s144
      %p146 = scmp.eq.s32.totalorder %s24, 0
      %p147 = por %p145, %p146
      %p148 = scmp.le.s32.totalorder 1, %s18
      %p149 = scmp.lt.s32.totalorder %s18, 5
      %p150 = pnand %p148, %p149
      %p151 = pneg %p150
      // Predicated region
      $region9: #{tpu_custom_call.1} parent=5 // pred_check
        _
      $region10: #{tpu_custom_call.1} parent=5 // pred_check_branch
        %153 = sbr.rel (%p150) target = $region12
      $region11: #{tpu_custom_call.1} parent=5 // pred_region
        %s154 = ssub.s32 %s18, 1
      $region12: #{tpu_custom_call.1} parent=5 // pred_fallthru
        _
      %p155 = scmp.lt.s32.totalorder %s18, 4
      // Predicated region
      $region13: #{tpu_custom_call.1} parent=5 // pred_check
        %p156 = pneg %p155
      $region14: #{tpu_custom_call.1} parent=5 // pred_check_branch
        %158 = sbr.rel (%p156) target = $region16
      $region15: #{tpu_custom_call.1} parent=5 // pred_region
        // Predicated region
        $region17: #{tpu_custom_call.1} parent=15 // pred_check
          %p159 = pneg %p50
        $region18: #{tpu_custom_call.1} parent=15 // pred_check_branch
          %161 = sbr.rel (%p159) target = $region20
        $region19: #{tpu_custom_call.1} parent=15 // pred_region
          %s162 = sand.u32 %s40, 1
          %s163 = scalar_lea.sflag [#allocation3], %s162
          %s164 = sand.u32 %s40, 1
          %s165 = smul.addr %s164, 12
          %s166 = scalar_lea.vmem [#allocation2], %s165
          %s168 = ssub.s32 192, 192
          %169 = vsyncadd %s163, %s168
          %s170 = smul.addr %s25, 3
          %s171 = smul.addr %s170, 64
          %s172 = scalar_lea.hbm %s0, %s171
          %s173 = sshll.u32 %s166, 4
          %s174 = int_to_ptr.vmem [resolvable:$true] %s173
          %179 = dma.hbm_to_vmem [thread:$0]  %s172, 192, %s174, %s163, 64, 64, 4
        $region20: #{tpu_custom_call.1} parent=15 // pred_fallthru
          _
        // Predicated region
        $region21: #{tpu_custom_call.1} parent=15 // pred_check
          %p180 = pneg %p78
        $region22: #{tpu_custom_call.1} parent=15 // pred_check_branch
          %182 = sbr.rel (%p180) target = $region24
        $region23: #{tpu_custom_call.1} parent=15 // pred_region
          %s183 = sand.u32 %s18, 1
          %s184 = scalar_lea.sflag [#allocation6], %s183
          %s185 = sand.u32 %s68, 1
          %s186 = smul.addr %s185, 24
          %s187 = scalar_lea.vmem [#allocation5], %s186
          %s189 = ssub.s32 384, 384
          %190 = vsyncadd %s184, %s189
          %s191 = smul.addr %s25, 6
          %s192 = sadd.s32 %s26, %s191
          %s193 = smul.addr %s192, 128
          %s194 = scalar_lea.hbm %s1, %s193
          %s195 = sshll.u32 %s187, 4
          %s196 = int_to_ptr.vmem [resolvable:$true] %s195
          %201 = dma.hbm_to_vmem [thread:$0]  %s194, 384, %s196, %s184, 256, 128, 8
        $region24: #{tpu_custom_call.1} parent=15 // pred_fallthru
          _
        // Predicated region
        $region25: #{tpu_custom_call.1} parent=15 // pred_check
          %p202 = pneg %p106
        $region26: #{tpu_custom_call.1} parent=15 // pred_check_branch
          %204 = sbr.rel (%p202) target = $region28
        $region27: #{tpu_custom_call.1} parent=15 // pred_region
          %s205 = sand.u32 %s18, 1
          %s206 = scalar_lea.sflag [#allocation6], %s205
          %s207 = sand.u32 %s96, 1
          %s208 = smul.addr %s207, 24
          %s209 = scalar_lea.vmem [#allocation7], %s208
          %s211 = ssub.s32 384, 384
          %212 = vsyncadd %s206, %s211
          %s213 = smul.addr %s25, 6
          %s214 = sadd.s32 %s26, %s213
          %s215 = smul.addr %s214, 128
          %s216 = scalar_lea.hbm %s2, %s215
          %s217 = sshll.u32 %s209, 4
          %s218 = int_to_ptr.vmem [resolvable:$true] %s217
          %223 = dma.hbm_to_vmem [thread:$0]  %s216, 384, %s218, %s206, 256, 128, 8
        $region28: #{tpu_custom_call.1} parent=15 // pred_fallthru
          _
      $region16: #{tpu_custom_call.1} parent=5 // pred_fallthru
        _
      %p224 = scmp.le.s32.totalorder 1, %s18
      %p225 = scmp.lt.s32.totalorder %s18, 5
      %p226 = pnand %p224, %p225
      %p227 = pneg %p226
      // Predicated region
      $region29: #{tpu_custom_call.1} parent=5 // pred_check
        _
      $region30: #{tpu_custom_call.1} parent=5 // pred_check_branch
        %229 = sbr.rel (%p226) target = $region32
      $region31: #{tpu_custom_call.1} parent=5 // pred_region
        %s230 = ssub.s32 %s18, 1
        %s231 = sand.u32 %s43, 1
        %s232 = scalar_lea.sflag [#allocation3], %s231
        %s233 = sand.u32 %s43, 1
        %s234 = smul.addr %s233, 12
        %s235 = scalar_lea.vmem [#allocation2], %s234
        // Predicated region
        $region33: #{tpu_custom_call.1} parent=31 // pred_check
          %p236 = pneg %p56
        $region34: #{tpu_custom_call.1} parent=31 // pred_check_branch
          %238 = sbr.rel (%p236) target = $region36
        $region35: #{tpu_custom_call.1} parent=31 // pred_region
          %239 = dma.done %s232, 192
        $region36: #{tpu_custom_call.1} parent=31 // pred_fallthru
          _
        %s240 = sand.u32 %s23, 1
        %s241 = scalar_lea.sflag [#allocation6], %s240
        %s242 = sand.u32 %s71, 1
        %s243 = smul.addr %s242, 24
        %s244 = scalar_lea.vmem [#allocation5], %s243
        // Predicated region
        $region37: #{tpu_custom_call.1} parent=31 // pred_check
          %p245 = pneg %p84
        $region38: #{tpu_custom_call.1} parent=31 // pred_check_branch
          %247 = sbr.rel (%p245) target = $region40
        $region39: #{tpu_custom_call.1} parent=31 // pred_region
          %248 = dma.done %s241, 384
        $region40: #{tpu_custom_call.1} parent=31 // pred_fallthru
          _
        %s249 = sand.u32 %s23, 1
        %s250 = scalar_lea.sflag [#allocation6], %s249
        %s251 = sand.u32 %s99, 1
        %s252 = smul.addr %s251, 24
        %s253 = scalar_lea.vmem [#allocation7], %s252
        // Predicated region
        $region41: #{tpu_custom_call.1} parent=31 // pred_check
          %p254 = pneg %p112
        $region42: #{tpu_custom_call.1} parent=31 // pred_check_branch
          %256 = sbr.rel (%p254) target = $region44
        $region43: #{tpu_custom_call.1} parent=31 // pred_region
          %257 = dma.done %s250, 384
        $region44: #{tpu_custom_call.1} parent=31 // pred_fallthru
          _
        %s258 = sand.u32 %s43, 1
        %s259 = scalar_lea.sflag [#allocation3], %s258
        %s260 = sand.u32 %s43, 1
        %s261 = smul.addr %s260, 12
        %s262 = scalar_lea.vmem [#allocation2], %s261
        %p263 = pneg %p56
        %p264 = pneg %p53
        %s265 = sand.u32 %s23, 1
        %s266 = scalar_lea.sflag [#allocation6], %s265
        %s267 = sand.u32 %s71, 1
        %s268 = smul.addr %s267, 24
        %s269 = scalar_lea.vmem [#allocation5], %s268
        %p270 = pneg %p84
        %p271 = pneg %p81
        %s272 = sand.u32 %s23, 1
        %s273 = scalar_lea.sflag [#allocation6], %s272
        %s274 = sand.u32 %s99, 1
        %s275 = smul.addr %s274, 24
        %s276 = scalar_lea.vmem [#allocation7], %s275
        %p277 = pneg %p112
        %p278 = pneg %p109
        %p279 = pneg %p140
        %p280 = pneg %p137
        %s281 = sand.u32 %s127, 1
        %s282 = scalar_lea.sflag [#allocation4], %s281
        %s283 = sand.u32 %s127, 1
        %s284 = smul.addr %s283, 24
        %s285 = scalar_lea.vmem [#allocation8], %s284
        %s286 = smul.u32 %s28, 8
        %s287 = sshra.s32 %s286, 3
        %s288 = sand.u32 %s286, 7
        %s289 = smul.addr %s287, 4
        %s290 = scalar_lea.vmem %s235, %s289 [#allocation2]
        %v291 = vld [vmem:[%s290] sm:$0xf]
        %v292 = vld [vmem:[%s290 + $0x4] sm:$0xf]
        %v293 = vunpack.c.l.bf16 %v291
        %v294 = vunpack.c.l.bf16 %v292
        %295 = vrot.lane.b32.xlu0 %v293, 127
        %v296 = vpop.permute.xlu0 %295
        %297 = vrot.lane.b32.xlu0 %v294, 127
        %v298 = vpop.permute.xlu0 %297
        %v299 = vadd.f32 %v293, %v296
        %v300 = vadd.f32 %v294, %v298
        %301 = vrot.lane.b32.xlu0 %v293, 126
        %v302 = vpop.permute.xlu0 %301
        %303 = vrot.lane.b32.xlu0 %v294, 126
        %v304 = vpop.permute.xlu0 %303
        %v305 = vadd.f32 %v299, %v302
        %v306 = vadd.f32 %v300, %v304
        %307 = vrot.lane.b32.xlu0 %v293, 125
        %v308 = vpop.permute.xlu0 %307
        %309 = vrot.lane.b32.xlu0 %v294, 125
        %v310 = vpop.permute.xlu0 %309
        %v311 = vadd.f32 %v305, %v308
        %v312 = vadd.f32 %v306, %v310
        %313 = vrot.lane.b32.xlu0 %v293, 124
        %v314 = vpop.permute.xlu0 %313
        %315 = vrot.lane.b32.xlu0 %v294, 124
        %v316 = vpop.permute.xlu0 %315
        %v317 = vadd.f32 %v311, %v314
        %v318 = vadd.f32 %v312, %v316
        %v319 = vrot.slane %v317, 1
        %v320 = vrot.slane %v318, 1
        %v321 = vlaneseq
        %v322 = vshrl.u32 %v321, 7
        %vm323 = vcmp.lt.s32.totalorder %v322, 7
        %v324 = vsel %vm323, %v319, %v320
        %v325 = vadd.f32 %v317, %v324
        %v326 = vrot.slane %v317, 2
        %v327 = vrot.slane %v318, 2
        %vm328 = vcmp.lt.s32.totalorder %v322, 6
        %v329 = vsel %vm328, %v326, %v327
        %v330 = vadd.f32 %v325, %v329
        %v331 = vrot.slane %v317, 3
        %v332 = vrot.slane %v318, 3
        %vm333 = vcmp.lt.s32.totalorder %v322, 5
        %v334 = vsel %vm333, %v331, %v332
        %v335 = vadd.f32 %v330, %v334
        %v336 = vrot.slane %v317, 4
        %v337 = vrot.slane %v318, 4
        %vm338 = vcmp.lt.s32.totalorder %v322, 4
        %v339 = vsel %vm338, %v336, %v337
        %v340 = vadd.f32 %v335, %v339
        %v341 = vmul.f32 %v340, 0.00015686275
        %v342 = vld [vmem:[%s244] sm:$0xff]
        %v343 = vld [vmem:[%s244 + $0x8] sm:$0xff]
        %v344 = vld [vmem:[%s244 + $0x10] sm:$0xff]
        %v345 = vld [vmem:[%s253] sm:$0xff]
        %v346 = vld [vmem:[%s253 + $0x8] sm:$0xff]
        %v347 = vld [vmem:[%s253 + $0x10] sm:$0xff]
        %v348 = vsub.f32 %v342, %v345
        %v349 = vsub.f32 %v343, %v346
        %v350 = vsub.f32 %v344, %v347
        %v351 = vmul.f32 %v341, %v348
        %v352 = vmul.f32 %v341, %v349
        %v353 = vmul.f32 %v341, %v350
        %v354 = vadd.f32 %v345, %v351
        %v355 = vadd.f32 %v346, %v352
        %v356 = vadd.f32 %v347, %v353
        %vm357 = vcmask 130048
        %358 = vst.msk [vmem:[%s285] sm:$0xff] %vm357, %v354
        %359 = vst.msk [vmem:[%s285 + $0x8] sm:$0xff] %vm357, %v355
        %360 = vst.msk [vmem:[%s285 + $0x10] sm:$0xff] %vm357, %v356
        %s361 = sand.u32 %s127, 1
        %s362 = scalar_lea.sflag [#allocation4], %s361
        %s363 = sand.u32 %s127, 1
        %s364 = smul.addr %s363, 24
        %s365 = scalar_lea.vmem [#allocation8], %s364
        // Predicated region
        $region45: #{tpu_custom_call.1} parent=31 // pred_check
          %p366 = pneg %p137
        $region46: #{tpu_custom_call.1} parent=31 // pred_check_branch
          %368 = sbr.rel (%p366) target = $region48
        $region47: #{tpu_custom_call.1} parent=31 // pred_region
          %s370 = ssub.s32 384, 384
          %371 = vsyncadd %s362, %s370
          %s372 = smul.addr %s27, 6
          %s373 = sadd.s32 %s28, %s372
          %s374 = smul.addr %s373, 128
          %s375 = scalar_lea.hbm %s3, %s374
          %s376 = sshll.u32 %s365, 4
          %s377 = int_to_ptr.vmem [resolvable:$true] %s376
          %382 = dma.vmem_to_hbm [thread:$0]  %s377, 384, %s375, %s362, 128, 256, 8
        $region48: #{tpu_custom_call.1} parent=31 // pred_fallthru
          _
      $region32: #{tpu_custom_call.1} parent=5 // pred_fallthru
        _
      %p383 = scmp.le.s32.totalorder 2, %s18
      // Predicated region
      $region49: #{tpu_custom_call.1} parent=5 // pred_check
        %p384 = pneg %p383
      $region50: #{tpu_custom_call.1} parent=5 // pred_check_branch
        %386 = sbr.rel (%p384) target = $region52
      $region51: #{tpu_custom_call.1} parent=5 // pred_region
        %s387 = ssub.s32 %s18, 2
        // Predicated region
        $region53: #{tpu_custom_call.1} parent=51 // pred_check
          %p388 = pneg %p143
        $region54: #{tpu_custom_call.1} parent=51 // pred_check_branch
          %390 = sbr.rel (%p388) target = $region56
        $region55: #{tpu_custom_call.1} parent=51 // pred_region
          %s391 = sand.u32 %s128, 1
          %s392 = scalar_lea.sflag [#allocation4], %s391
          %s393 = sand.u32 %s128, 1
          %s394 = smul.addr %s393, 24
          %s395 = scalar_lea.vmem [#allocation8], %s394
          %396 = dma.done %s392, 384
        $region56: #{tpu_custom_call.1} parent=51 // pred_fallthru
          _
      $region52: #{tpu_custom_call.1} parent=5 // pred_fallthru
        _
    $region6: #{tpu_custom_call.1} parent=1 // loop_footer
      %s22 = sadd.s32 1, %s18
    $region7: #{tpu_custom_call.1} parent=1 // loop_footer_branch
      %17 = sbr.rel target = $region3
    $region8: #{tpu_custom_call.1} parent=1 // loop_exit
      _
    %397 = vsyncpa [#allocation3], 1
    %s398 = scalar_lea.sflag [#allocation3], 1
    %399 = vsyncpa %s398, 1
    %400 = vsyncpa [#allocation6], 1
    %s401 = scalar_lea.sflag [#allocation6], 1
    %402 = vsyncpa %s401, 1
    %403 = vsyncpa [#allocation4], 1
    %s404 = scalar_lea.sflag [#allocation4], 1
    %405 = vsyncpa %s404, 1

</llo_original>
